<compile_context>
chip_gen: v5e
topology: v5e:2x2
jax: 0.10.0
libtpu: 0.0.40
codegen_flags: <defaults>
</compile_context>

<pallas_src>
import functools

import jax
import jax.numpy as jnp
from jax.experimental import pallas as pl
from jax.experimental.pallas import tpu as pltpu


_TINY_BYTES = 2 * 1024 * 1024           # below this, plain XLA transpose wins
_VMEM_BUDGET_BYTES = 16 * 1024 * 1024   # padded, double-buffered in+out blocks
_VMEM_LIMIT_BYTES = 32 * 1024 * 1024    # <= v7x scoped default; safe on v5e/v6e
_LANE = 128
_MAX_CONCAT_CHANNELS = 64               # bound vreg pressure in the flat kernel


def _rup(a, m):
    return ((a + m - 1) // m) * m


def _sublane(itemsize):
    # Packed sublane multiple: 8 rows for 4-byte, 16 for 2-byte, 32 for 1-byte.
    return max(8, 32 // max(1, itemsize))


# --------------------------------------------------------------------------
# Kernels
# --------------------------------------------------------------------------
def _swap_ch_kernel(x_ref, o_ref):
    """(tB, C, tH, W) -> (tB, tH, C, W): whole-block transpose + dense stores."""
    o_ref[...] = jnp.swapaxes(x_ref[...], 1, 2)


def _flat_ch_kernel(x_ref, o_ref, *, chunk):
    """(tB, C, tH, W) -> (tB, tH, C*W) for W < 128.

    o[b, h, c*W + w] = x[b, c, h, w]; each output row is the lane-wise
    concatenation of the C input rows, so stores are C*W lanes wide instead of
    W-wide masked stores.  For large C the concat/store is done in channel
    chunks to bound live vregs.
    """
    C = x_ref.shape[1]
    W = x_ref.shape[3]
    if C <= chunk:
        o_ref[...] = jnp.concatenate([x_ref[:, c] for c in range(C)], axis=-1)
    else:
        for c0 in range(0, C, chunk):
            c1 = min(C, c0 + chunk)
            o_ref[..., c0 * W:c1 * W] = jnp.concatenate(
                [x_ref[:, c] for c in range(c0, c1)], axis=-1)


def _pick_channel_chunk(C, W):
    if C <= _MAX_CONCAT_CHANNELS:
        return C
    # Prefer chunk widths that land on 128-lane boundaries (dense stores).
    for cg in range(_MAX_CONCAT_CHANNELS, 0, -1):
        if (cg * W) % _LANE == 0:
            return cg
    return _MAX_CONCAT_CHANNELS


# --------------------------------------------------------------------------
# Tiling plan (padded VMEM accounting)
# --------------------------------------------------------------------------
def _plan_tiles(B, C, H, W, itemsize, flat):
    """Pick (tB, tH) so padded, double-buffered in+out blocks fit the budget.

    Returns None if even the smallest legal tile does not fit (caller falls
    back to XLA's transpose instead of over-allocating VMEM).
    """
    s = _sublane(itemsize)
    rw = _rup(W, _LANE)

    def in_bytes(tB, tH):
        return tB * C * _rup(tH, s) * rw * itemsize

    def out_bytes(tB, tH):
        if flat:
            return tB * _rup(tH, s) * _rup(C * W, _LANE) * itemsize
        return tB * tH * _rup(C, s) * rw * itemsize

    def footprint(tB, tH):          # x2: Pallas double-buffers each operand
        return 2 * (in_bytes(tB, tH) + out_bytes(tB, tH))

    if footprint(1, H) <= _VMEM_BUDGET_BYTES:
        # A whole (C, H, W) slab fits: fold batch elements into the block so
        # small slabs still move in ~MiB-sized DMAs.
        tH = H
        tB = max(1, min(B, _VMEM_BUDGET_BYTES // footprint(1, H)))
        # Guarantee >= 2 grid steps (when splittable) so both v7x TCs run.
        if tB >= B:
            if B >= 2:
                tB = -(-B // 2)                      # -> grid_b == 2
            elif H >= 2 * s:
                tH = _rup(-(-H // 2), s)             # -> grid_h == 2
        return tB, tH

    # Slab too big: tile H with tB = 1.  Per sublane-rounded H-row cost:
    out_row = _rup(C * W, _LANE) if flat else _rup(C, s) * rw
    per_row = 2 * (C * rw + out_row) * itemsize
    max_rows = _VMEM_BUDGET_BYTES // per_row
    tH = (max_rows // s) * s
    if tH < s:
        return None
    return 1, min(tH, _rup(H, s))


# --------------------------------------------------------------------------
# Pallas dispatch + wrapper
# --------------------------------------------------------------------------
def _change_order_pallas(x):
    B, C, H, W = x.shape
    itemsize = jnp.dtype(x.dtype).itemsize
    flat = W < _LANE                       # W >= 128 (even misaligned): swapaxes
    plan = _plan_tiles(B, C, H, W, itemsize, flat)
    if plan is None:
        return jnp.moveaxis(x, -2, 1)      # pathological C*W: let XLA handle it
    tB, tH = plan
    grid = (pl.cdiv(B, tB), pl.cdiv(H, tH))
    cparams = pltpu.CompilerParams(
        dimension_semantics=("parallel", "parallel"),   # megacore on v7x
        vmem_limit_bytes=_VMEM_LIMIT_BYTES,
    )

    if not flat:
        return pl.pallas_call(
            _swap_ch_kernel,
            out_shape=jax.ShapeDtypeStruct((B, H, C, W), x.dtype),
            grid=grid,
            in_specs=[pl.BlockSpec((tB, C, tH, W), lambda ib, ih: (ib, 0, ih, 0))],
            out_specs=pl.BlockSpec((tB, tH, C, W), lambda ib, ih: (ib, ih, 0, 0)),
            compiler_params=cparams,
        )(x)

    # W < 128: present the output lane-dense as (B, H, C*W); splitting the
    # contiguous minor dim back into (C, W) afterwards is free.
    chunk = _pick_channel_chunk(C, W)
    y = pl.pallas_call(
        functools.partial(_flat_ch_kernel, chunk=chunk),
        out_shape=jax.ShapeDtypeStruct((B, H, C * W), x.dtype),
        grid=grid,
        in_specs=[pl.BlockSpec((tB, C, tH, W), lambda ib, ih: (ib, 0, ih, 0))],
        out_specs=pl.BlockSpec((tB, tH, C * W), lambda ib, ih: (ib, ih, 0)),
        compiler_params=cparams,
    )(x)
    return y.reshape(B, H, C, W)


def change_order(x, first_dim=-2, second_dim=1, force_pallas=False):
    """Pallas/JAX equivalent of ChangeOrderLayer(first_dim, second_dim)(x)."""
    ndim = x.ndim
    fd = first_dim % ndim
    sd = second_dim % ndim

    pallas_ok = (ndim == 4) and (fd, sd) == (2, 1)
    # If C == 1 or H == 1 the permute is a pure reshape -> free in XLA.
    trivial = pallas_ok and (x.shape[1] == 1 or x.shape[2] == 1)
    tiny = x.size * jnp.dtype(x.dtype).itemsize < _TINY_BYTES

    if pallas_ok and not trivial and (force_pallas or not tiny):
        y = _change_order_pallas(x)
    else:
        # Other dim configs / trivial / tiny tensors: XLA's native transpose is
        # already at the HBM roofline; a Pallas kernel only adds fixed overhead.
        y = jnp.moveaxis(x, first_dim, second_dim)

    # torch .squeeze(): drop every size-1 dim (static given the input shape).
    return jnp.squeeze(y)


if __name__ == "__main__":
    root = jax.random.PRNGKey(0)
    keys = jax.random.split(root, 6)

    def ref(v):
        return jnp.squeeze(jnp.moveaxis(v, -2, 1))

    # Case 1: spec-sized NCHW input; W=16 < 128 -> lane-dense flat kernel.
    x1 = jax.random.normal(keys[0], (2, 4, 16, 16), dtype=jnp.float32)
    out1 = jax.block_until_ready(change_order(x1, force_pallas=True))
    r1 = ref(x1)
    assert out1.shape == r1.shape == (2, 16, 4, 16), (out1.shape, r1.shape)
    assert out1.dtype == r1.dtype
    assert bool(jnp.array_equal(out1, r1))

    # Case 2: C*W == 128 -> fully lane-aligned flat-kernel stores.
    x2 = jax.random.normal(keys[1], (2, 8, 16, 16), dtype=jnp.float32)
    out2 = jax.block_until_ready(change_order(x2, force_pallas=True))
    assert out2.shape == (2, 16, 8, 16)
    assert bool(jnp.array_equal(out2, ref(x2)))

    # Case 3: W % 128 == 0 -> whole-block swapaxes kernel path.
    x3 = jax.random.normal(keys[2], (2, 4, 16, 128), dtype=jnp.float32)
    out3 = jax.block_until_ready(change_order(x3, force_pallas=True))
    assert out3.shape == (2, 16, 4, 128)
    assert bool(jnp.array_equal(out3, ref(x3)))

    # Case 4: W >= 128 but misaligned -> swapaxes path (masked tail group only).
    x4 = jax.random.normal(keys[3], (2, 4, 16, 160), dtype=jnp.float32)
    out4 = jax.block_until_ready(change_order(x4, force_pallas=True))
    assert out4.shape == (2, 16, 4, 160)
    assert bool(jnp.array_equal(out4, ref(x4)))

    # Case 5: bf16 -> 16-row packed-sublane tiles.
    x5 = jax.random.normal(keys[4], (2, 4, 32, 16), dtype=jnp.bfloat16)
    out5 = jax.block_until_ready(change_order(x5, force_pallas=True))
    assert out5.shape == (2, 32, 4, 16)
    assert bool(jnp.array_equal(out5, ref(x5)))

    # Case 6: B=4 tiny slabs -> batch folding (tB=2) with 2 parallel grid steps.
    x6 = jax.random.normal(keys[5], (4, 4, 16, 16), dtype=jnp.float32)
    out6 = jax.block_until_ready(change_order(x6, force_pallas=True))
    assert out6.shape == (4, 16, 4, 16)
    assert bool(jnp.array_equal(out6, ref(x6)))

    print("KERNEL_OK")
</pallas_src>

<mosaic_0001>
module attributes {stable_mosaic.version = 11 : i64} {
  func.func @_flat_ch_kernel(%arg0: i32, %arg1: i32, %arg2: memref<1x4x16x16xf32, #tpu.memory_space<vmem>>, %arg3: memref<1x16x64xf32, #tpu.memory_space<vmem>>) attributes {dimension_semantics = [#tpu.dimension_semantics<parallel>, #tpu.dimension_semantics<parallel>], iteration_bounds = array<i64: 2, 1>, scalar_prefetch = 0 : i64, scratch_operands = 0 : i64, tpu.core_type = #tpu.core_type<tc>, window_params = [{transform_indices = @transform_0, window_bounds = array<i64: 1, 4, 16, 16>}, {transform_indices = @transform_1, window_bounds = array<i64: 1, 16, 64>}]} {
    %c0 = arith.constant 0 : index
    %c0_0 = arith.constant 0 : index
    %c0_1 = arith.constant 0 : index
    %c0_2 = arith.constant 0 : index
    %0 = vector.load %arg2[%c0, %c0_0, %c0_1, %c0_2] : memref<1x4x16x16xf32, #tpu.memory_space<vmem>>, vector<1x1x16x16xf32>
    %1 = vector.shape_cast %0 : vector<1x1x16x16xf32> to vector<1x16x16xf32>
    %c0_3 = arith.constant 0 : index
    %c1 = arith.constant 1 : index
    %c0_4 = arith.constant 0 : index
    %c0_5 = arith.constant 0 : index
    %2 = vector.load %arg2[%c0_3, %c1, %c0_4, %c0_5] : memref<1x4x16x16xf32, #tpu.memory_space<vmem>>, vector<1x1x16x16xf32>
    %3 = vector.shape_cast %2 : vector<1x1x16x16xf32> to vector<1x16x16xf32>
    %c0_6 = arith.constant 0 : index
    %c2 = arith.constant 2 : index
    %c0_7 = arith.constant 0 : index
    %c0_8 = arith.constant 0 : index
    %4 = vector.load %arg2[%c0_6, %c2, %c0_7, %c0_8] : memref<1x4x16x16xf32, #tpu.memory_space<vmem>>, vector<1x1x16x16xf32>
    %5 = vector.shape_cast %4 : vector<1x1x16x16xf32> to vector<1x16x16xf32>
    %c0_9 = arith.constant 0 : index
    %c3 = arith.constant 3 : index
    %c0_10 = arith.constant 0 : index
    %c0_11 = arith.constant 0 : index
    %6 = vector.load %arg2[%c0_9, %c3, %c0_10, %c0_11] : memref<1x4x16x16xf32, #tpu.memory_space<vmem>>, vector<1x1x16x16xf32>
    %7 = vector.shape_cast %6 : vector<1x1x16x16xf32> to vector<1x16x16xf32>
    %8 = tpu.concatenate %1, %3, %5, %7 in 2 : vector<1x16x16xf32>, vector<1x16x16xf32>, vector<1x16x16xf32>, vector<1x16x16xf32> -> vector<1x16x64xf32>
    %c0_12 = arith.constant 0 : index
    %c0_13 = arith.constant 0 : index
    %c0_14 = arith.constant 0 : index
    %9 = vector.load %arg3[%c0_12, %c0_13, %c0_14] : memref<1x16x64xf32, #tpu.memory_space<vmem>>, vector<1x16x64xf32>
    tpu.vector_store %arg3[%c0_12, %c0_13, %c0_14], %8 {strides = array<i32>} : memref<1x16x64xf32, #tpu.memory_space<vmem>>, vector<1x16x64xf32>,
    return
  }
  func.func @transform_0(%arg0: i32, %arg1: i32) -> (i32, i32, i32, i32) {
    %c0_i32 = arith.constant 0 : i32
    %c0_i32_0 = arith.constant 0 : i32
    %c0_i32_1 = arith.constant 0 : i32
    return %arg0, %c0_i32, %arg1, %c0_i32_0 : i32, i32, i32, i32
  }
  func.func @transform_1(%arg0: i32, %arg1: i32) -> (i32, i32, i32) {
    %c0_i32 = arith.constant 0 : i32
    %c0_i32_0 = arith.constant 0 : i32
    return %arg0, %arg1, %c0_i32 : i32, i32, i32
  }
}

</mosaic_0001>

<llo_original>
// kernel: tpu_custom_call.1
$region0: #{tpu_custom_call.1}
  #allocation0 [shape = 'u32[]', space=smem, size = 0x4, offset = 0x4, fixed_abs, tag = 'smem constant byte address 0x4 - core index']
  #allocation1 [shape = 'u32[72,128]{1,0:T(1,128)}', space=vmem, size = 0x9000, scoped, tag = 'internal scratch']
  %s0 = inlined_call_operand.hbm [shape: f32[2,4,16,16], index: 0, kind: input, shape index: {}]
  %s1 = inlined_call_operand.hbm [shape: f32[2,16,64], index: 1, kind: output, shape index: {}]
  %s2 = sld [smem:[#allocation0]]
  $region41: #{tpu_custom_call.1} parent=0
    _
  %s4 = ssub.s32 1, %s2
  %s5 = scalar_select 0, %s4, %s2
  $region1: #{tpu_custom_call.1} parent=0
    #allocation2 [shape = 'u8[65536]{0}', space=vmem, size = 0x10000, scoped, tag = 'input window, operand 0']
    #allocation3 [shape = 's32[2]{0}', space=sflag, size = 0x8, scoped, tag = 'scoped memory for tpu_custom_call.1']
    #allocation4 [shape = 's32[2]{0}', space=sflag, size = 0x8, scoped, tag = 'scoped memory for tpu_custom_call.1']
    #allocation5 [shape = 'u8[16384]{0}', space=vmem, size = 0x4000, scoped, tag = 'output window, operand 0']
    %6 = vsyncpa [#allocation3], 0
    %s7 = scalar_lea.sflag [#allocation3], 1
    %8 = vsyncpa %s7, 0
    %9 = vsyncpa [#allocation4], 0
    %s10 = scalar_lea.sflag [#allocation4], 1
    %11 = vsyncpa %s10, 0
    loop: start=0, step=1, limit=4
    $region2: #{tpu_custom_call.1} parent=1 // loop_pre_header
      _
    $region3: #{tpu_custom_call.1} parent=1 // loop_header
      %s13 = sphi 0, %s17
      %p14 = scmp.ge.s32.totalorder %s13, 4
      %s20 = sphi 0, %s32
      %s21 = sphi 0, %s28
      %s22 = sphi 0, %s20
      %s23 = sphi 0, %s21
      %s24 = sphi 0, %s22
      %s25 = sphi 0, %s23
      %s37 = sphi 0, %s39
      %s40 = sphi 0, %s37
      %s41 = sphi 0, %s40
      %s57 = sphi 0, %s41
      %s65 = sphi 0, %s67
      %s68 = sphi 0, %s65
      %s69 = sphi 0, %s68
      %s85 = sphi 0, %s69
    $region4: #{tpu_custom_call.1} parent=1 // loop_header_branch
      %16 = sbr.rel (%p14) target = $region8
    $region5: #{tpu_custom_call.1} parent=1 // loop_body
      %s18 = ssub.s32 %s13, 1
      %s19 = ssub.s32 %s13, 2
      %s26 = sadd.s32 1, %s21
      %p27 = scmp.ge.s32.totalorder %s26, 1
      %s28 = scalar_select %p27, 0, %s26
      %s29 = sadd.s32 1, %s20
      %s30 = scalar_select %p27, %s29, %s20
      %p31 = scmp.ge.s32.totalorder %s30, 2
      %s32 = scalar_select %p31, 0, %s30
      %s33 = ssub.s32 %s20, %s32
      %s34 = ssub.s32 %s21, %s28
      %s35 = sor.u32 %s33, %s34
      %p36 = scmp.eq.s32.totalorder %s35, 0
      %s38 = sadd.s32 %s37, 1
      %s39 = scalar_select %p36, %s37, %s38
      %p42 = pneg %p36
      %p43 = scmp.eq.s32.totalorder %s13, 1
      %p44 = por %p42, %p43
      %p45 = scmp.ne.s32.totalorder %s37, %s40
      %p46 = scmp.eq.s32.totalorder %s13, 0
      %p47 = por %p45, %p46
      %p48 = scmp.ne.s32.totalorder %s37, %s40
      %p49 = scmp.eq.s32.totalorder %s18, 1
      %p50 = por %p48, %p49
      %p51 = scmp.ne.s32.totalorder %s40, %s41
      %p52 = scmp.eq.s32.totalorder %s18, 0
      %p53 = por %p51, %p52
      %p54 = scmp.ne.s32.totalorder %s40, %s41
      %p55 = scmp.eq.s32.totalorder %s19, 1
      %p56 = por %p54, %p55
      %p58 = scmp.ne.s32.totalorder %s41, %s57
      %p59 = scmp.eq.s32.totalorder %s19, 0
      %p60 = por %p58, %p59
      %s61 = ssub.s32 %s20, %s32
      %s62 = ssub.s32 %s21, %s28
      %s63 = sor.u32 %s61, %s62
      %p64 = scmp.eq.s32.totalorder %s63, 0
      %s66 = sadd.s32 %s65, 1
      %s67 = scalar_select %p64, %s65, %s66
      %p70 = pneg %p64
      %p71 = scmp.eq.s32.totalorder %s13, 1
      %p72 = por %p70, %p71
      %p73 = scmp.ne.s32.totalorder %s65, %s68
      %p74 = scmp.eq.s32.totalorder %s13, 0
      %p75 = por %p73, %p74
      %p76 = scmp.ne.s32.totalorder %s65, %s68
      %p77 = scmp.eq.s32.totalorder %s18, 1
      %p78 = por %p76, %p77
      %p79 = scmp.ne.s32.totalorder %s68, %s69
      %p80 = scmp.eq.s32.totalorder %s18, 0
      %p81 = por %p79, %p80
      %p82 = scmp.ne.s32.totalorder %s68, %s69
      %p83 = scmp.eq.s32.totalorder %s19, 1
      %p84 = por %p82, %p83
      %p86 = scmp.ne.s32.totalorder %s69, %s85
      %p87 = scmp.eq.s32.totalorder %s19, 0
      %p88 = por %p86, %p87
      %p89 = scmp.le.s32.totalorder 1, %s13
      %p90 = scmp.lt.s32.totalorder %s13, 3
      %p91 = pnand %p89, %p90
      %p92 = pneg %p91
      // Predicated region
      $region9: #{tpu_custom_call.1} parent=5 // pred_check
        _
      $region10: #{tpu_custom_call.1} parent=5 // pred_check_branch
        %94 = sbr.rel (%p91) target = $region12
      $region11: #{tpu_custom_call.1} parent=5 // pred_region
        %s95 = ssub.s32 %s13, 1
      $region12: #{tpu_custom_call.1} parent=5 // pred_fallthru
        _
      %p96 = scmp.lt.s32.totalorder %s13, 2
      // Predicated region
      $region13: #{tpu_custom_call.1} parent=5 // pred_check
        %p97 = pneg %p96
      $region14: #{tpu_custom_call.1} parent=5 // pred_check_branch
        %99 = sbr.rel (%p97) target = $region16
      $region15: #{tpu_custom_call.1} parent=5 // pred_region
        // Predicated region
        $region17: #{tpu_custom_call.1} parent=15 // pred_check
          %p100 = pneg %p47
        $region18: #{tpu_custom_call.1} parent=15 // pred_check_branch
          %102 = sbr.rel (%p100) target = $region20
        $region19: #{tpu_custom_call.1} parent=15 // pred_region
          %s103 = sand.u32 %s37, 1
          %s104 = scalar_lea.sflag [#allocation3], %s103
          %s105 = sand.u32 %s37, 1
          %s106 = smul.addr %s105, 64
          %s107 = scalar_lea.vmem [#allocation2], %s106
          %s108 = smul.u32 2, %s21
          %110 = vsyncadd %s104, 0
          %s111 = smul.addr %s20, 8
          %s112 = sadd.s32 %s108, %s111
          %s113 = smul.addr %s112, 8
          %s114 = scalar_lea.hbm %s0, %s113
          %s115 = sshll.u32 %s114, 4
          %s116 = int_to_ptr.hbm [resolvable:$true] %s115
          %s117 = sshll.u32 %s107, 4
          %s118 = int_to_ptr.vmem [resolvable:$true] %s117
          %123 = dma.hbm_to_vmem [thread:$0]  %s116, 1024, %s118, %s104, 128, 128, 8
        $region20: #{tpu_custom_call.1} parent=15 // pred_fallthru
          _
      $region16: #{tpu_custom_call.1} parent=5 // pred_fallthru
        _
      %p124 = scmp.le.s32.totalorder 1, %s13
      %p125 = scmp.lt.s32.totalorder %s13, 3
      %p126 = pnand %p124, %p125
      %p127 = pneg %p126
      // Predicated region
      $region21: #{tpu_custom_call.1} parent=5 // pred_check
        _
      $region22: #{tpu_custom_call.1} parent=5 // pred_check_branch
        %129 = sbr.rel (%p126) target = $region24
      $region23: #{tpu_custom_call.1} parent=5 // pred_region
        %s130 = ssub.s32 %s13, 1
        %s131 = sand.u32 %s40, 1
        %s132 = scalar_lea.sflag [#allocation3], %s131
        %s133 = sand.u32 %s40, 1
        %s134 = smul.addr %s133, 64
        %s135 = scalar_lea.vmem [#allocation2], %s134
        // Predicated region
        $region25: #{tpu_custom_call.1} parent=23 // pred_check
          %p136 = pneg %p53
        $region26: #{tpu_custom_call.1} parent=23 // pred_check_branch
          %138 = sbr.rel (%p136) target = $region28
        $region27: #{tpu_custom_call.1} parent=23 // pred_region
          %140 = dma.done %s132, 1024
        $region28: #{tpu_custom_call.1} parent=23 // pred_fallthru
          _
        %s141 = sand.u32 %s40, 1
        %s142 = scalar_lea.sflag [#allocation3], %s141
        %s143 = sand.u32 %s40, 1
        %s144 = smul.addr %s143, 64
        %s145 = scalar_lea.vmem [#allocation2], %s144
        %p146 = pneg %p53
        %p147 = pneg %p50
        %p148 = pneg %p81
        %p149 = pneg %p78
        %s150 = sand.u32 %s68, 1
        %s151 = scalar_lea.sflag [#allocation4], %s150
        %s152 = sand.u32 %s68, 1
        %s153 = smul.addr %s152, 16
        %s154 = scalar_lea.vmem [#allocation5], %s153
        %s155 = smul.u32 2, %s23
        %s156 = smul.u32 2, %s23
        %v157 = vld [vmem:[%s135] sm:$0xff]
        %v158 = vld [vmem:[%s135 + $0x8] sm:$0xff]
        %s159 = scalar_lea.vmem %s135, 16 [#allocation2]
        %v160 = vld [vmem:[%s159] sm:$0xff]
        %v161 = vld [vmem:[%s159 + $0x8] sm:$0xff]
        %s162 = scalar_lea.vmem %s135, 32 [#allocation2]
        %v163 = vld [vmem:[%s162] sm:$0xff]
        %v164 = vld [vmem:[%s162 + $0x8] sm:$0xff]
        %s165 = scalar_lea.vmem %s135, 48 [#allocation2]
        %v166 = vld [vmem:[%s165] sm:$0xff]
        %v167 = vld [vmem:[%s165 + $0x8] sm:$0xff]
        %170 = vrot.lane.b32.xlu0 %v160, 16
        %v171 = vpop.permute.xlu0 %170
        %172 = vrot.lane.b32.xlu0 %v161, 16
        %v173 = vpop.permute.xlu0 %172
        %178 = vrot.lane.b32.xlu0 %v163, 32
        %v179 = vpop.permute.xlu0 %178
        %180 = vrot.lane.b32.xlu0 %v164, 32
        %v181 = vpop.permute.xlu0 %180
        %186 = vrot.lane.b32.xlu0 %v166, 48
        %v187 = vpop.permute.xlu0 %186
        %188 = vrot.lane.b32.xlu0 %v167, 48
        %v189 = vpop.permute.xlu0 %188
        %vm192 = vcmask 130048
        %v193 = vsel %vm192, %v157, %v171
        %v194 = vsel %vm192, %v158, %v173
        %vm195 = vcmask 261120
        %v196 = vsel %vm195, %v193, %v179
        %v197 = vsel %vm195, %v194, %v181
        %vm198 = vcmask 392192
        %v199 = vsel %vm198, %v196, %v187
        %v200 = vsel %vm198, %v197, %v189
        %vm201 = vcmask 523264
        %202 = vst.msk [vmem:[%s154] sm:$0xff] %vm201, %v199
        %203 = vst.msk [vmem:[%s154 + $0x8] sm:$0xff] %vm201, %v200
        %s204 = sand.u32 %s68, 1
        %s205 = scalar_lea.sflag [#allocation4], %s204
        %s206 = sand.u32 %s68, 1
        %s207 = smul.addr %s206, 16
        %s208 = scalar_lea.vmem [#allocation5], %s207
        // Predicated region
        $region29: #{tpu_custom_call.1} parent=23 // pred_check
          %p209 = pneg %p78
        $region30: #{tpu_custom_call.1} parent=23 // pred_check_branch
          %211 = sbr.rel (%p209) target = $region32
        $region31: #{tpu_custom_call.1} parent=23 // pred_region
          %s212 = smul.u32 2, %s23
          %214 = vsyncadd %s205, 0
          %s215 = smul.addr %s22, 2
          %s216 = sadd.s32 %s212, %s215
          %s217 = smul.addr %s216, 8
          %s218 = scalar_lea.hbm %s1, %s217
          %s219 = sshll.u32 %s208, 4
          %s220 = int_to_ptr.vmem [resolvable:$true] %s219
          %s221 = sshll.u32 %s218, 4
          %s222 = int_to_ptr.hbm [resolvable:$true] %s221
          %227 = dma.vmem_to_hbm [thread:$0]  %s220, 256, %s222, %s205, 128, 128, 8
        $region32: #{tpu_custom_call.1} parent=23 // pred_fallthru
          _
      $region24: #{tpu_custom_call.1} parent=5 // pred_fallthru
        _
      %p228 = scmp.le.s32.totalorder 2, %s13
      // Predicated region
      $region33: #{tpu_custom_call.1} parent=5 // pred_check
        %p229 = pneg %p228
      $region34: #{tpu_custom_call.1} parent=5 // pred_check_branch
        %231 = sbr.rel (%p229) target = $region36
      $region35: #{tpu_custom_call.1} parent=5 // pred_region
        %s232 = ssub.s32 %s13, 2
        // Predicated region
        $region37: #{tpu_custom_call.1} parent=35 // pred_check
          %p233 = pneg %p84
        $region38: #{tpu_custom_call.1} parent=35 // pred_check_branch
          %235 = sbr.rel (%p233) target = $region40
        $region39: #{tpu_custom_call.1} parent=35 // pred_region
          %s236 = sand.u32 %s69, 1
          %s237 = scalar_lea.sflag [#allocation4], %s236
          %s238 = sand.u32 %s69, 1
          %s239 = smul.addr %s238, 16
          %s240 = scalar_lea.vmem [#allocation5], %s239
          %242 = dma.done %s237, 256
        $region40: #{tpu_custom_call.1} parent=35 // pred_fallthru
          _
      $region36: #{tpu_custom_call.1} parent=5 // pred_fallthru
        _
    $region6: #{tpu_custom_call.1} parent=1 // loop_footer
      %s17 = sadd.s32 1, %s13
    $region7: #{tpu_custom_call.1} parent=1 // loop_footer_branch
      %12 = sbr.rel target = $region3
    $region8: #{tpu_custom_call.1} parent=1 // loop_exit
      _
    %243 = vsyncpa [#allocation3], 1
    %s244 = scalar_lea.sflag [#allocation3], 1
    %245 = vsyncpa %s244, 1
    %246 = vsyncpa [#allocation4], 1
    %s247 = scalar_lea.sflag [#allocation4], 1
    %248 = vsyncpa %s247, 1

</llo_original>
